<compile_context>
chip_gen: v7x
topology: tpu7x:2x2x1
jax: 0.10.0
libtpu: 0.0.40
codegen_flags: <defaults>
</compile_context>

<pallas_src>
import functools

import jax
import jax.numpy as jnp
from jax.experimental import pallas as pl
from jax.experimental.pallas import tpu as pltpu


def _ffn_kernel(x_ref, w1_ref, b1_ref, w2_ref, b2_ref, o_ref):
    # x_ref:  (tm, hid_p)   bf16      w1_ref: (hid_p, pf_p) bf16
    # b1_ref: (1, pf_p)     f32       w2_ref: (pf_p, hid_p) bf16
    # b2_ref: (1, hid_p)    f32       o_ref:  (tm, hid_p)   x.dtype
    h = jnp.dot(x_ref[...], w1_ref[...], preferred_element_type=jnp.float32)
    h = jnp.maximum(h + b1_ref[...], 0.0)            # bias + ReLU in f32
    # dropout == identity (eval mode)
    y = jnp.dot(h.astype(jnp.bfloat16), w2_ref[...],
                preferred_element_type=jnp.float32)  # bf16 MXU, f32 acc
    y = y + b2_ref[...]
    o_ref[...] = y.astype(o_ref.dtype)


def _round_up(x, m):
    return ((x + m - 1) // m) * m


@functools.partial(jax.jit, static_argnames=("tm",))
def positionwise_feedforward(x, w1_t, b1, w2_t, b2, *, tm=256):
    """x: [batch, seq, hid]; w1_t: [hid, pf]; b1: [pf]; w2_t: [pf, hid]; b2: [hid]."""
    batch, seq, hid = x.shape
    pf = w1_t.shape[1]
    M = batch * seq

    # Lane/sublane-aligned padded sizes (zero padding keeps the math exact).
    hid_p = _round_up(hid, 128)
    pf_p = _round_up(pf, 128)
    M_p = _round_up(M, tm)

    x2d = jnp.pad(x.reshape(M, hid), ((0, M_p - M), (0, hid_p - hid)))
    w1_p = jnp.pad(w1_t, ((0, hid_p - hid), (0, pf_p - pf)))
    w2_p = jnp.pad(w2_t, ((0, pf_p - pf), (0, hid_p - hid)))
    b1_p = jnp.pad(b1, (0, pf_p - pf)).reshape(1, pf_p).astype(jnp.float32)
    b2_p = jnp.pad(b2, (0, hid_p - hid)).reshape(1, hid_p).astype(jnp.float32)

    # bf16 matmul operands (MXU peak rate, half the DMA/VMEM bytes);
    # accumulation stays f32 inside the kernel.
    x_bf = x2d.astype(jnp.bfloat16)
    w1_bf = w1_p.astype(jnp.bfloat16)
    w2_bf = w2_p.astype(jnp.bfloat16)

    out2d = pl.pallas_call(
        _ffn_kernel,
        out_shape=jax.ShapeDtypeStruct((M_p, hid_p), x.dtype),
        grid_spec=pltpu.PrefetchScalarGridSpec(
            num_scalar_prefetch=0,
            grid=(M_p // tm,),
            in_specs=[
                # x rows tile: pipelined (double-buffered) along the M grid axis
                pl.BlockSpec((tm, hid_p), lambda i: (i, 0)),
                # grid-invariant weights/biases: single-buffered residents
                pl.BlockSpec((hid_p, pf_p), lambda i: (0, 0),
                             pipeline_mode=pl.Buffered(1)),
                pl.BlockSpec((1, pf_p), lambda i: (0, 0),
                             pipeline_mode=pl.Buffered(1)),
                pl.BlockSpec((pf_p, hid_p), lambda i: (0, 0),
                             pipeline_mode=pl.Buffered(1)),
                pl.BlockSpec((1, hid_p), lambda i: (0, 0),
                             pipeline_mode=pl.Buffered(1)),
            ],
            out_specs=pl.BlockSpec((tm, hid_p), lambda i: (i, 0)),
        ),
        compiler_params=pltpu.CompilerParams(
            dimension_semantics=("parallel",),   # shards M across TCs on v7x
            vmem_limit_bytes=64 * 1024 * 1024,   # resident weights + big row tile
        ),
    )(x_bf, w1_bf, b1_p, w2_bf, b2_p)

    return out2d[:M, :hid].reshape(batch, seq, hid)


def _init_linear(key, in_dim, out_dim, dtype=jnp.float32):
    """Deterministic init matching nn.Linear shapes (weight: [out, in], bias: [out])."""
    kw, kb = jax.random.split(key)
    bound = 1.0 / (in_dim ** 0.5)
    w = jax.random.uniform(kw, (out_dim, in_dim), dtype, -bound, bound)
    b = jax.random.uniform(kb, (out_dim,), dtype, -bound, bound)
    return w, b


if __name__ == "__main__":
    batch, seq, hid_dim, pf_dim = 2, 8, 32, 64

    key = jax.random.PRNGKey(0)
    kx, k1, k2 = jax.random.split(key, 3)

    x = jax.random.normal(kx, (batch, seq, hid_dim), jnp.float32)
    w1, b1 = _init_linear(k1, hid_dim, pf_dim)   # fc_1: Linear(hid, pf)
    w2, b2 = _init_linear(k2, pf_dim, hid_dim)   # fc_2: Linear(pf, hid)

    # Kernel takes transposed weights so it can do x @ W directly.
    out = positionwise_feedforward(x, w1.T, b1, w2.T, b2)
    out = jax.block_until_ready(out)

    # Pure-JAX f32 reference (eval-mode dropout == identity).
    h_ref = jnp.maximum(x @ w1.T + b1, 0.0)
    ref = h_ref @ w2.T + b2
    assert out.shape == (batch, seq, hid_dim)
    # bf16 matmul operands with f32 accumulation -> allow bf16-level tolerance.
    assert jnp.allclose(out, ref, atol=5e-2, rtol=5e-2), "mismatch vs reference"

    print("KERNEL_OK")
</pallas_src>

<mosaic_0001>
module attributes {stable_mosaic.version = 11 : i64} {
  func.func @_ffn_kernel(%arg0: i32, %arg1: memref<256x128xbf16, #tpu.memory_space<vmem>>, %arg2: memref<128x128xbf16, #tpu.memory_space<vmem>>, %arg3: memref<1x128xf32, #tpu.memory_space<vmem>>, %arg4: memref<128x128xbf16, #tpu.memory_space<vmem>>, %arg5: memref<1x128xf32, #tpu.memory_space<vmem>>, %arg6: memref<256x128xf32, #tpu.memory_space<vmem>>) attributes {dimension_semantics = [#tpu.dimension_semantics<parallel>], iteration_bounds = array<i64: 1>, scalar_prefetch = 0 : i64, scratch_operands = 0 : i64, tpu.core_type = #tpu.core_type<tc>, window_params = [{transform_indices = @transform_0, window_bounds = array<i64: 256, 128>}, {pipeline_mode = #tpu.pipeline_mode<synchronous>, transform_indices = @transform_1, window_bounds = array<i64: 128, 128>}, {pipeline_mode = #tpu.pipeline_mode<synchronous>, transform_indices = @transform_2, window_bounds = array<i64: 1, 128>}, {pipeline_mode = #tpu.pipeline_mode<synchronous>, transform_indices = @transform_3, window_bounds = array<i64: 128, 128>}, {pipeline_mode = #tpu.pipeline_mode<synchronous>, transform_indices = @transform_4, window_bounds = array<i64: 1, 128>}, {transform_indices = @transform_5, window_bounds = array<i64: 256, 128>}]} {
    %c0 = arith.constant 0 : index
    %c0_0 = arith.constant 0 : index
    %0 = vector.load %arg1[%c0, %c0_0] : memref<256x128xbf16, #tpu.memory_space<vmem>>, vector<256x128xbf16>
    %c0_1 = arith.constant 0 : index
    %c0_2 = arith.constant 0 : index
    %1 = vector.load %arg2[%c0_1, %c0_2] : memref<128x128xbf16, #tpu.memory_space<vmem>>, vector<128x128xbf16>
    %cst = arith.constant dense<0.000000e+00> : vector<256x128xf32>
    %2 = tpu.matmul %0, %1, %cst {dimension_numbers = #tpu.dot_dimension_numbers<[1], [0], [0], [1], [0, 0, 1, 1], [], []>} : vector<256x128xbf16>, vector<128x128xbf16>, vector<256x128xf32> -> vector<256x128xf32>
    %c0_3 = arith.constant 0 : index
    %c0_4 = arith.constant 0 : index
    %3 = vector.load %arg3[%c0_3, %c0_4] : memref<1x128xf32, #tpu.memory_space<vmem>>, vector<1x128xf32>
    %4 = vector.broadcast %3 : vector<1x128xf32> to vector<256x128xf32>
    %5 = arith.addf %2, %4 : vector<256x128xf32>
    %cst_5 = arith.constant 0.000000e+00 : f32
    %6 = vector.broadcast %cst_5 : f32 to vector<256x128xf32>
    %7 = arith.maximumf %5, %6 : vector<256x128xf32>
    %8 = arith.truncf %7 : vector<256x128xf32> to vector<256x128xbf16>
    %c0_6 = arith.constant 0 : index
    %c0_7 = arith.constant 0 : index
    %9 = vector.load %arg4[%c0_6, %c0_7] : memref<128x128xbf16, #tpu.memory_space<vmem>>, vector<128x128xbf16>
    %cst_8 = arith.constant dense<0.000000e+00> : vector<256x128xf32>
    %10 = tpu.matmul %8, %9, %cst_8 {dimension_numbers = #tpu.dot_dimension_numbers<[1], [0], [0], [1], [0, 0, 1, 1], [], []>} : vector<256x128xbf16>, vector<128x128xbf16>, vector<256x128xf32> -> vector<256x128xf32>
    %c0_9 = arith.constant 0 : index
    %c0_10 = arith.constant 0 : index
    %11 = vector.load %arg5[%c0_9, %c0_10] : memref<1x128xf32, #tpu.memory_space<vmem>>, vector<1x128xf32>
    %12 = vector.broadcast %11 : vector<1x128xf32> to vector<256x128xf32>
    %13 = arith.addf %10, %12 : vector<256x128xf32>
    %c0_11 = arith.constant 0 : index
    %c0_12 = arith.constant 0 : index
    %14 = vector.load %arg6[%c0_11, %c0_12] : memref<256x128xf32, #tpu.memory_space<vmem>>, vector<256x128xf32>
    tpu.vector_store %arg6[%c0_11, %c0_12], %13 {strides = array<i32>} : memref<256x128xf32, #tpu.memory_space<vmem>>, vector<256x128xf32>,
    return
  }
  func.func @transform_0(%arg0: i32) -> (i32, i32) {
    %c0_i32 = arith.constant 0 : i32
    %c0_i32_0 = arith.constant 0 : i32
    return %arg0, %c0_i32 : i32, i32
  }
  func.func @transform_1(%arg0: i32) -> (i32, i32) {
    %c0_i32 = arith.constant 0 : i32
    %c0_i32_0 = arith.constant 0 : i32
    %c0_i32_1 = arith.constant 0 : i32
    return %c0_i32, %c0_i32_0 : i32, i32
  }
  func.func @transform_2(%arg0: i32) -> (i32, i32) {
    %c0_i32 = arith.constant 0 : i32
    %c0_i32_0 = arith.constant 0 : i32
    %c0_i32_1 = arith.constant 0 : i32
    return %c0_i32, %c0_i32_0 : i32, i32
  }
  func.func @transform_3(%arg0: i32) -> (i32, i32) {
    %c0_i32 = arith.constant 0 : i32
    %c0_i32_0 = arith.constant 0 : i32
    %c0_i32_1 = arith.constant 0 : i32
    return %c0_i32, %c0_i32_0 : i32, i32
  }
  func.func @transform_4(%arg0: i32) -> (i32, i32) {
    %c0_i32 = arith.constant 0 : i32
    %c0_i32_0 = arith.constant 0 : i32
    %c0_i32_1 = arith.constant 0 : i32
    return %c0_i32, %c0_i32_0 : i32, i32
  }
  func.func @transform_5(%arg0: i32) -> (i32, i32) {
    %c0_i32 = arith.constant 0 : i32
    %c0_i32_0 = arith.constant 0 : i32
    return %arg0, %c0_i32 : i32, i32
  }
}

</mosaic_0001>

<llo_original>
// kernel: positionwise_feedforward.1
$region0: #{positionwise_feedforward.1}
  #allocation0 [shape = 'u32[]', space=smem, size = 0x4, offset = 0x4, fixed_abs, tag = 'smem constant byte address 0x4 - core index']
  #allocation1 [shape = 'u32[144,128]{1,0:T(1,128)}', space=vmem, size = 0x12000, scoped, tag = 'internal scratch']
  %s0 = inlined_call_operand.hbm [shape: bf16[256,128], index: 0, kind: input, shape index: {}]
  %s1 = inlined_call_operand.hbm [shape: bf16[128,128], index: 1, kind: input, shape index: {}]
  %s2 = inlined_call_operand.hbm [shape: f32[1,128], index: 2, kind: input, shape index: {}]
  %s3 = inlined_call_operand.hbm [shape: bf16[128,128], index: 3, kind: input, shape index: {}]
  %s4 = inlined_call_operand.hbm [shape: f32[1,128], index: 4, kind: input, shape index: {}]
  %s5 = inlined_call_operand.hbm [shape: f32[256,128], index: 5, kind: output, shape index: {}]
  %s6 = sld [smem:[#allocation0]]
  $region50: #{positionwise_feedforward.1} parent=0
    _
  %s8 = ssub.s32 1, %s6
  %s9 = scalar_select 0, %s8, %s6
  $region1: #{positionwise_feedforward.1} parent=0
    #allocation2 [shape = 'u8[65536]{0}', space=vmem, size = 0x10000, scoped, tag = 'input window, operand 0, single buffered']
    #allocation3 [shape = 's32[1]{0}', space=sflag, size = 0x4, scoped, tag = 'scoped memory for positionwise_feedforward.1']
    #allocation4 [shape = 's32[1]{0}', space=sflag, size = 0x4, scoped, tag = 'scoped memory for positionwise_feedforward.1']
    #allocation5 [shape = 'u8[32768]{0}', space=vmem, size = 0x8000, scoped, tag = 'input window, operand 1, single buffered']
    #allocation6 [shape = 's32[1]{0}', space=sflag, size = 0x4, scoped, tag = 'scoped memory for positionwise_feedforward.1']
    #allocation7 [shape = 'u8[512]{0}', space=vmem, size = 0x400, scoped, tag = 'input window, operand 2, single buffered']
    #allocation8 [shape = 'u8[32768]{0}', space=vmem, size = 0x8000, scoped, tag = 'input window, operand 3, single buffered']
    #allocation9 [shape = 's32[1]{0}', space=sflag, size = 0x4, scoped, tag = 'scoped memory for positionwise_feedforward.1']
    #allocation10 [shape = 'u8[512]{0}', space=vmem, size = 0x400, scoped, tag = 'input window, operand 4, single buffered']
    #allocation11 [shape = 'u8[131072]{0}', space=vmem, size = 0x20000, scoped, tag = 'output window, operand 0, single buffered']
    %10 = vsyncpa [#allocation3], 0
    %11 = vsyncpa [#allocation6], 0
    %12 = vsyncpa [#allocation9], 0
    %13 = vsyncpa [#allocation4], 0
    // Predicated region
    $region2: #{positionwise_feedforward.1} parent=1 // pred_check
      _
    $region3: #{positionwise_feedforward.1} parent=1 // pred_check_branch
      %15 = sbr.rel (0) target = $region5
    $region4: #{positionwise_feedforward.1} parent=1 // pred_region
      %s17 = ssub.s32 2048, 2048
      %18 = vsyncadd [#allocation3], %s17
      %s19 = sshll.u32 [#allocation2], 4
      %s20 = int_to_ptr.vmem [resolvable:$true] %s19
      %25 = dma.hbm_to_vmem [thread:$0]  %s0, 2048, %s20, [#allocation3], 64, 64, 4
    $region5: #{positionwise_feedforward.1} parent=1 // pred_fallthru
      _
    // Predicated region
    $region6: #{positionwise_feedforward.1} parent=1 // pred_check
      _
    $region7: #{positionwise_feedforward.1} parent=1 // pred_check_branch
      %27 = sbr.rel (0) target = $region9
    $region8: #{positionwise_feedforward.1} parent=1 // pred_region
      %s29 = ssub.s32 1024, 1024
      %30 = vsyncadd [#allocation6], %s29
      %s31 = sshll.u32 [#allocation5], 4
      %s32 = int_to_ptr.vmem [resolvable:$true] %s31
      %37 = dma.hbm_to_vmem [thread:$0]  %s1, 1024, %s32, [#allocation6], 64, 64, 4
    $region9: #{positionwise_feedforward.1} parent=1 // pred_fallthru
      _
    // Predicated region
    $region10: #{positionwise_feedforward.1} parent=1 // pred_check
      _
    $region11: #{positionwise_feedforward.1} parent=1 // pred_check_branch
      %39 = sbr.rel (0) target = $region13
    $region12: #{positionwise_feedforward.1} parent=1 // pred_region
      %s41 = ssub.s32 16, 16
      %42 = vsyncadd [#allocation6], %s41
      %s44 = sshll.u32 [#allocation7], 4
      %s45 = int_to_ptr.vmem [resolvable:$true] %s44
      %47 = dma.hbm_to_vmem [thread:$0]  %s2, 16, %s45, [#allocation6]
    $region13: #{positionwise_feedforward.1} parent=1 // pred_fallthru
      _
    // Predicated region
    $region14: #{positionwise_feedforward.1} parent=1 // pred_check
      _
    $region15: #{positionwise_feedforward.1} parent=1 // pred_check_branch
      %49 = sbr.rel (0) target = $region17
    $region16: #{positionwise_feedforward.1} parent=1 // pred_region
      %s51 = ssub.s32 1024, 1024
      %52 = vsyncadd [#allocation9], %s51
      %s53 = sshll.u32 [#allocation8], 4
      %s54 = int_to_ptr.vmem [resolvable:$true] %s53
      %59 = dma.hbm_to_vmem [thread:$0]  %s3, 1024, %s54, [#allocation9], 64, 64, 4
    $region17: #{positionwise_feedforward.1} parent=1 // pred_fallthru
      _
    // Predicated region
    $region18: #{positionwise_feedforward.1} parent=1 // pred_check
      _
    $region19: #{positionwise_feedforward.1} parent=1 // pred_check_branch
      %61 = sbr.rel (0) target = $region21
    $region20: #{positionwise_feedforward.1} parent=1 // pred_region
      %s63 = ssub.s32 16, 16
      %64 = vsyncadd [#allocation9], %s63
      %s66 = sshll.u32 [#allocation10], 4
      %s67 = int_to_ptr.vmem [resolvable:$true] %s66
      %69 = dma.hbm_to_vmem [thread:$0]  %s4, 16, %s67, [#allocation9]
    $region21: #{positionwise_feedforward.1} parent=1 // pred_fallthru
      _
    // Predicated region
    $region22: #{positionwise_feedforward.1} parent=1 // pred_check
      _
    $region23: #{positionwise_feedforward.1} parent=1 // pred_check_branch
      %71 = sbr.rel (0) target = $region25
    $region24: #{positionwise_feedforward.1} parent=1 // pred_region
      %72 = dma.done [#allocation3], 2048
    $region25: #{positionwise_feedforward.1} parent=1 // pred_fallthru
      _
    // Predicated region
    $region26: #{positionwise_feedforward.1} parent=1 // pred_check
      _
    $region27: #{positionwise_feedforward.1} parent=1 // pred_check_branch
      %74 = sbr.rel (0) target = $region29
    $region28: #{positionwise_feedforward.1} parent=1 // pred_region
      %75 = dma.done [#allocation6], 1024
    $region29: #{positionwise_feedforward.1} parent=1 // pred_fallthru
      _
    // Predicated region
    $region30: #{positionwise_feedforward.1} parent=1 // pred_check
      _
    $region31: #{positionwise_feedforward.1} parent=1 // pred_check_branch
      %77 = sbr.rel (0) target = $region33
    $region32: #{positionwise_feedforward.1} parent=1 // pred_region
      %78 = dma.done [#allocation6], 16
    $region33: #{positionwise_feedforward.1} parent=1 // pred_fallthru
      _
    // Predicated region
    $region34: #{positionwise_feedforward.1} parent=1 // pred_check
      _
    $region35: #{positionwise_feedforward.1} parent=1 // pred_check_branch
      %80 = sbr.rel (0) target = $region37
    $region36: #{positionwise_feedforward.1} parent=1 // pred_region
      %81 = dma.done [#allocation9], 1024
    $region37: #{positionwise_feedforward.1} parent=1 // pred_fallthru
      _
    // Predicated region
    $region38: #{positionwise_feedforward.1} parent=1 // pred_check
      _
    $region39: #{positionwise_feedforward.1} parent=1 // pred_check_branch
      %83 = sbr.rel (0) target = $region41
    $region40: #{positionwise_feedforward.1} parent=1 // pred_region
      %84 = dma.done [#allocation9], 16
    $region41: #{positionwise_feedforward.1} parent=1 // pred_fallthru
      _
    %v86 = vld [vmem:[#allocation2] sm:$0xf]
    %v87 = vld [vmem:[#allocation2 + $0x4] sm:$0xf]
    %v88 = vld [vmem:[#allocation2 + $0x8] sm:$0xf]
    %v89 = vld [vmem:[#allocation2 + $0xc] sm:$0xf]
    %v90 = vld [vmem:[#allocation2 + $0x10] sm:$0xf]
    %v91 = vld [vmem:[#allocation2 + $0x14] sm:$0xf]
    %v92 = vld [vmem:[#allocation2 + $0x18] sm:$0xf]
    %v93 = vld [vmem:[#allocation2 + $0x1c] sm:$0xf]
    %v94 = vld [vmem:[#allocation2 + $0x20] sm:$0xf]
    %v95 = vld [vmem:[#allocation2 + $0x24] sm:$0xf]
    %v96 = vld [vmem:[#allocation2 + $0x28] sm:$0xf]
    %v97 = vld [vmem:[#allocation2 + $0x2c] sm:$0xf]
    %v98 = vld [vmem:[#allocation2 + $0x30] sm:$0xf]
    %v99 = vld [vmem:[#allocation2 + $0x34] sm:$0xf]
    %v100 = vld [vmem:[#allocation2 + $0x38] sm:$0xf]
    %v101 = vld [vmem:[#allocation2 + $0x3c] sm:$0xf]
    %v102 = vld [vmem:[#allocation2 + $0x40] sm:$0xf]
    %v103 = vld [vmem:[#allocation2 + $0x44] sm:$0xf]
    %v104 = vld [vmem:[#allocation2 + $0x48] sm:$0xf]
    %v105 = vld [vmem:[#allocation2 + $0x4c] sm:$0xf]
    %v106 = vld [vmem:[#allocation2 + $0x50] sm:$0xf]
    %v107 = vld [vmem:[#allocation2 + $0x54] sm:$0xf]
    %v108 = vld [vmem:[#allocation2 + $0x58] sm:$0xf]
    %v109 = vld [vmem:[#allocation2 + $0x5c] sm:$0xf]
    %v110 = vld [vmem:[#allocation2 + $0x60] sm:$0xf]
    %v111 = vld [vmem:[#allocation2 + $0x64] sm:$0xf]
    %v112 = vld [vmem:[#allocation2 + $0x68] sm:$0xf]
    %v113 = vld [vmem:[#allocation2 + $0x6c] sm:$0xf]
    %v114 = vld [vmem:[#allocation2 + $0x70] sm:$0xf]
    %v115 = vld [vmem:[#allocation2 + $0x74] sm:$0xf]
    %v116 = vld [vmem:[#allocation2 + $0x78] sm:$0xf]
    %v117 = vld [vmem:[#allocation2 + $0x7c] sm:$0xf]
    %v118 = vld [vmem:[#allocation5] sm:$0xf]
    %v119 = vld [vmem:[#allocation5 + $0x4] sm:$0xf]
    %v120 = vld [vmem:[#allocation5 + $0x8] sm:$0xf]
    %v121 = vld [vmem:[#allocation5 + $0xc] sm:$0xf]
    %v122 = vld [vmem:[#allocation5 + $0x10] sm:$0xf]
    %v123 = vld [vmem:[#allocation5 + $0x14] sm:$0xf]
    %v124 = vld [vmem:[#allocation5 + $0x18] sm:$0xf]
    %v125 = vld [vmem:[#allocation5 + $0x1c] sm:$0xf]
    %v126 = vld [vmem:[#allocation5 + $0x20] sm:$0xf]
    %v127 = vld [vmem:[#allocation5 + $0x24] sm:$0xf]
    %v128 = vld [vmem:[#allocation5 + $0x28] sm:$0xf]
    %v129 = vld [vmem:[#allocation5 + $0x2c] sm:$0xf]
    %v130 = vld [vmem:[#allocation5 + $0x30] sm:$0xf]
    %v131 = vld [vmem:[#allocation5 + $0x34] sm:$0xf]
    %v132 = vld [vmem:[#allocation5 + $0x38] sm:$0xf]
    %v133 = vld [vmem:[#allocation5 + $0x3c] sm:$0xf]
    %v134 = vld [vmem:[#allocation7] sm:$0x1]
    %v136 = vlaneseq
    %v137 = vshrl.u32 %v136, 7
    %v138 = vsub.s32 0, %v137
    %v139 = vrot.slane %v134, %v138
    %v173 = vunpack.c.l.b16 %v86
    %v174 = vunpack.c.l.b16 %v87
    %v175 = vunpack.c.l.b16 %v88
    %v176 = vunpack.c.l.b16 %v89
    %v177 = vunpack.c.l.b16 %v90
    %v178 = vunpack.c.l.b16 %v91
    %v179 = vunpack.c.l.b16 %v92
    %v180 = vunpack.c.l.b16 %v93
    %v181 = vunpack.c.l.b16 %v94
    %v182 = vunpack.c.l.b16 %v95
    %v183 = vunpack.c.l.b16 %v96
    %v184 = vunpack.c.l.b16 %v97
    %v185 = vunpack.c.l.b16 %v98
    %v186 = vunpack.c.l.b16 %v99
    %v187 = vunpack.c.l.b16 %v100
    %v188 = vunpack.c.l.b16 %v101
    %v189 = vunpack.c.l.b16 %v102
    %v190 = vunpack.c.l.b16 %v103
    %v191 = vunpack.c.l.b16 %v104
    %v192 = vunpack.c.l.b16 %v105
    %v193 = vunpack.c.l.b16 %v106
    %v194 = vunpack.c.l.b16 %v107
    %v195 = vunpack.c.l.b16 %v108
    %v196 = vunpack.c.l.b16 %v109
    %v197 = vunpack.c.l.b16 %v110
    %v198 = vunpack.c.l.b16 %v111
    %v199 = vunpack.c.l.b16 %v112
    %v200 = vunpack.c.l.b16 %v113
    %v201 = vunpack.c.l.b16 %v114
    %v202 = vunpack.c.l.b16 %v115
    %v203 = vunpack.c.l.b16 %v116
    %v204 = vunpack.c.l.b16 %v117
    %v205 = vpack.c.b16 %v174, %v173
    %v206 = vpack.c.b16 %v176, %v175
    %v207 = vpack.c.b16 %v178, %v177
    %v208 = vpack.c.b16 %v180, %v179
    %v209 = vpack.c.b16 %v182, %v181
    %v210 = vpack.c.b16 %v184, %v183
    %v211 = vpack.c.b16 %v186, %v185
    %v212 = vpack.c.b16 %v188, %v187
    %v213 = vpack.c.b16 %v190, %v189
    %v214 = vpack.c.b16 %v192, %v191
    %v215 = vpack.c.b16 %v194, %v193
    %v216 = vpack.c.b16 %v196, %v195
    %v217 = vpack.c.b16 %v198, %v197
    %v218 = vpack.c.b16 %v200, %v199
    %v219 = vpack.c.b16 %v202, %v201
    %v220 = vpack.c.b16 %v204, %v203
    %v253 = vunpack.c.l.b16 %v118
    %v254 = vunpack.c.l.b16 %v119
    %v255 = vunpack.c.l.b16 %v120
    %v256 = vunpack.c.l.b16 %v121
    %v257 = vunpack.c.l.b16 %v122
    %v258 = vunpack.c.l.b16 %v123
    %v259 = vunpack.c.l.b16 %v124
    %v260 = vunpack.c.l.b16 %v125
    %v261 = vunpack.c.l.b16 %v126
    %v262 = vunpack.c.l.b16 %v127
    %v263 = vunpack.c.l.b16 %v128
    %v264 = vunpack.c.l.b16 %v129
    %v265 = vunpack.c.l.b16 %v130
    %v266 = vunpack.c.l.b16 %v131
    %v267 = vunpack.c.l.b16 %v132
    %v268 = vunpack.c.l.b16 %v133
    %v269 = vpack.c.b16 %v254, %v253
    %v270 = vpack.c.b16 %v256, %v255
    %v271 = vpack.c.b16 %v258, %v257
    %v272 = vpack.c.b16 %v260, %v259
    %v273 = vpack.c.b16 %v262, %v261
    %v274 = vpack.c.b16 %v264, %v263
    %v275 = vpack.c.b16 %v266, %v265
    %v276 = vpack.c.b16 %v268, %v267
    %285 = vmatprep.subr.bf16.mxu0 0
    %286 = vmatpush1.bf16.msra.mxu0 %v269
    %287 = vmatprep.subr.bf16.mxu0 0
    %288 = vmatpush1.bf16.msra.mxu0 %v270
    %289 = vmatprep.subr.bf16.mxu0 0
    %290 = vmatpush1.bf16.msra.mxu0 %v271
    %291 = vmatprep.subr.bf16.mxu0 0
    %292 = vmatpush1.bf16.msra.mxu0 %v272
    %293 = vmatprep.subr.bf16.mxu0 0
    %294 = vmatpush1.bf16.msra.mxu0 %v273
    %295 = vmatprep.subr.bf16.mxu0 0
    %296 = vmatpush1.bf16.msra.mxu0 %v274
    %297 = vmatprep.subr.bf16.mxu0 0
    %298 = vmatpush1.bf16.msra.mxu0 %v275
    %299 = vmatprep.subr.bf16.mxu0 0
    %300 = vmatpush1.bf16.msra.mxu0 %v276
    %301 = vmatprep.subr.bf16.mxu0 0
    %302 = vmatpush1.bf16.msra.mxu0 0
    %303 = vmatprep.subr.bf16.mxu0 0
    %304 = vmatpush1.bf16.msra.mxu0 0
    %305 = vmatprep.subr.bf16.mxu0 0
    %306 = vmatpush1.bf16.msra.mxu0 0
    %307 = vmatprep.subr.bf16.mxu0 0
    %308 = vmatpush1.bf16.msra.mxu0 0
    %309 = vmatprep.subr.bf16.mxu0 0
    %310 = vmatpush1.bf16.msra.mxu0 0
    %311 = vmatprep.subr.bf16.mxu0 0
    %312 = vmatpush1.bf16.msra.mxu0 0
    %313 = vmatprep.subr.bf16.mxu0 0
    %314 = vmatpush1.bf16.msra.mxu0 0
    %315 = vmatprep.subr.bf16.mxu0 0
    %316 = vmatpush1.bf16.msra.mxu0 0
    %317 = vmatprep.mubr.bf16.mxu0 0
    %318 = vmatmul.mubr.bf16.gmra.mrb[0].mxu0 %v205
    %v319 = vpop.f32.mrb[0].mxu0
    %v320 = vadd.f32 %v139, %v319
    %v321 = vpop.f32.mrb[0].mxu0
    %v322 = vpop.f32.mrb[0].mxu0
    %v323 = vadd.f32 %v139, %v322
    %v324 = vpop.f32.mrb[0].mxu0
    %325 = vmatprep.mubr.bf16.mxu0 0
    %326 = vmatmul.mubr.bf16.gmra.mrb[0].mxu0 %v206
    %v327 = vpop.f32.mrb[0].mxu0
    %v328 = vadd.f32 %v139, %v327
    %v329 = vpop.f32.mrb[0].mxu0
    %v330 = vpop.f32.mrb[0].mxu0
    %v331 = vadd.f32 %v139, %v330
    %v332 = vpop.f32.mrb[0].mxu0
    %333 = vmatprep.mubr.bf16.mxu0 0
    %334 = vmatmul.mubr.bf16.gmra.mrb[0].mxu0 %v207
    %v335 = vpop.f32.mrb[0].mxu0
    %v336 = vadd.f32 %v139, %v335
    %v337 = vpop.f32.mrb[0].mxu0
    %v338 = vpop.f32.mrb[0].mxu0
    %v339 = vadd.f32 %v139, %v338
    %v340 = vpop.f32.mrb[0].mxu0
    %341 = vmatprep.mubr.bf16.mxu0 0
    %342 = vmatmul.mubr.bf16.gmra.mrb[0].mxu0 %v208
    %v343 = vpop.f32.mrb[0].mxu0
    %v344 = vadd.f32 %v139, %v343
    %v345 = vpop.f32.mrb[0].mxu0
    %v346 = vpop.f32.mrb[0].mxu0
    %v347 = vadd.f32 %v139, %v346
    %v348 = vpop.f32.mrb[0].mxu0
    %349 = vmatprep.mubr.bf16.mxu0 0
    %350 = vmatmul.mubr.bf16.gmra.mrb[0].mxu0 %v209
    %v351 = vpop.f32.mrb[0].mxu0
    %v352 = vadd.f32 %v139, %v351
    %v353 = vpop.f32.mrb[0].mxu0
    %v354 = vpop.f32.mrb[0].mxu0
    %v355 = vadd.f32 %v139, %v354
    %v356 = vpop.f32.mrb[0].mxu0
    %357 = vmatprep.mubr.bf16.mxu0 0
    %358 = vmatmul.mubr.bf16.gmra.mrb[0].mxu0 %v210
    %v359 = vpop.f32.mrb[0].mxu0
    %v360 = vadd.f32 %v139, %v359
    %v361 = vpop.f32.mrb[0].mxu0
    %v362 = vpop.f32.mrb[0].mxu0
    %v363 = vadd.f32 %v139, %v362
    %v364 = vpop.f32.mrb[0].mxu0
    %365 = vmatprep.mubr.bf16.mxu0 0
    %366 = vmatmul.mubr.bf16.gmra.mrb[0].mxu0 %v211
    %v367 = vpop.f32.mrb[0].mxu0
    %v368 = vadd.f32 %v139, %v367
    %v369 = vpop.f32.mrb[0].mxu0
    %v370 = vpop.f32.mrb[0].mxu0
    %v371 = vadd.f32 %v139, %v370
    %v372 = vpop.f32.mrb[0].mxu0
    %373 = vmatprep.mubr.bf16.mxu0 0
    %374 = vmatmul.mubr.bf16.gmra.mrb[0].mxu0 %v212
    %v375 = vpop.f32.mrb[0].mxu0
    %v376 = vadd.f32 %v139, %v375
    %v377 = vpop.f32.mrb[0].mxu0
    %v378 = vpop.f32.mrb[0].mxu0
    %v379 = vadd.f32 %v139, %v378
    %v380 = vpop.f32.mrb[0].mxu0
    %381 = vmatprep.mubr.bf16.mxu0 0
    %382 = vmatmul.mubr.bf16.gmra.mrb[0].mxu0 %v213
    %v383 = vpop.f32.mrb[0].mxu0
    %v384 = vadd.f32 %v139, %v383
    %v385 = vpop.f32.mrb[0].mxu0
    %v386 = vpop.f32.mrb[0].mxu0
    %v387 = vadd.f32 %v139, %v386
    %v388 = vpop.f32.mrb[0].mxu0
    %389 = vmatprep.mubr.bf16.mxu0 0
    %390 = vmatmul.mubr.bf16.gmra.mrb[0].mxu0 %v214
    %v391 = vpop.f32.mrb[0].mxu0
    %v392 = vadd.f32 %v139, %v391
    %v393 = vpop.f32.mrb[0].mxu0
    %v394 = vpop.f32.mrb[0].mxu0
    %v395 = vadd.f32 %v139, %v394
    %v396 = vpop.f32.mrb[0].mxu0
    %397 = vmatprep.mubr.bf16.mxu0 0
    %398 = vmatmul.mubr.bf16.gmra.mrb[0].mxu0 %v215
    %v399 = vpop.f32.mrb[0].mxu0
    %v400 = vadd.f32 %v139, %v399
    %v401 = vpop.f32.mrb[0].mxu0
    %v402 = vpop.f32.mrb[0].mxu0
    %v403 = vadd.f32 %v139, %v402
    %v404 = vpop.f32.mrb[0].mxu0
    %405 = vmatprep.mubr.bf16.mxu0 0
    %406 = vmatmul.mubr.bf16.gmra.mrb[0].mxu0 %v216
    %v407 = vpop.f32.mrb[0].mxu0
    %v408 = vadd.f32 %v139, %v407
    %v409 = vpop.f32.mrb[0].mxu0
    %v410 = vpop.f32.mrb[0].mxu0
    %v411 = vadd.f32 %v139, %v410
    %v412 = vpop.f32.mrb[0].mxu0
    %413 = vmatprep.mubr.bf16.mxu0 0
    %414 = vmatmul.mubr.bf16.gmra.mrb[0].mxu0 %v217
    %v415 = vpop.f32.mrb[0].mxu0
    %v416 = vadd.f32 %v139, %v415
    %v417 = vpop.f32.mrb[0].mxu0
    %v418 = vpop.f32.mrb[0].mxu0
    %v419 = vadd.f32 %v139, %v418
    %v420 = vpop.f32.mrb[0].mxu0
    %421 = vmatprep.mubr.bf16.mxu0 0
    %422 = vmatmul.mubr.bf16.gmra.mrb[0].mxu0 %v218
    %v423 = vpop.f32.mrb[0].mxu0
    %v424 = vadd.f32 %v139, %v423
    %v425 = vpop.f32.mrb[0].mxu0
    %v426 = vpop.f32.mrb[0].mxu0
    %v427 = vadd.f32 %v139, %v426
    %v428 = vpop.f32.mrb[0].mxu0
    %429 = vmatprep.mubr.bf16.mxu0 0
    %430 = vmatmul.mubr.bf16.gmra.mrb[0].mxu0 %v219
    %v431 = vpop.f32.mrb[0].mxu0
    %v432 = vadd.f32 %v139, %v431
    %v433 = vpop.f32.mrb[0].mxu0
    %v434 = vpop.f32.mrb[0].mxu0
    %v435 = vadd.f32 %v139, %v434
    %v436 = vpop.f32.mrb[0].mxu0
    %437 = vmatprep.mubr.bf16.mxu0 0
    %438 = vmatmul.mubr.bf16.gmra.mrb[0].mxu0 %v220
    %v439 = vpop.f32.mrb[0].mxu0
    %v440 = vadd.f32 %v139, %v439
    %v441 = vpop.f32.mrb[0].mxu0
    %v442 = vpop.f32.mrb[0].mxu0
    %v443 = vadd.f32 %v139, %v442
    %v444 = vpop.f32.mrb[0].mxu0
    %445 = vdwg.mxu0
    %v446 = vmax.f32 %v320, 0.0
    %v447 = vmax.f32 %v323, 0.0
    %v448 = vmax.f32 %v328, 0.0
    %v449 = vmax.f32 %v331, 0.0
    %v450 = vmax.f32 %v336, 0.0
    %v451 = vmax.f32 %v339, 0.0
    %v452 = vmax.f32 %v344, 0.0
    %v453 = vmax.f32 %v347, 0.0
    %v454 = vmax.f32 %v352, 0.0
    %v455 = vmax.f32 %v355, 0.0
    %v456 = vmax.f32 %v360, 0.0
    %v457 = vmax.f32 %v363, 0.0
    %v458 = vmax.f32 %v368, 0.0
    %v459 = vmax.f32 %v371, 0.0
    %v460 = vmax.f32 %v376, 0.0
    %v461 = vmax.f32 %v379, 0.0
    %v462 = vmax.f32 %v384, 0.0
    %v463 = vmax.f32 %v387, 0.0
    %v464 = vmax.f32 %v392, 0.0
    %v465 = vmax.f32 %v395, 0.0
    %v466 = vmax.f32 %v400, 0.0
    %v467 = vmax.f32 %v403, 0.0
    %v468 = vmax.f32 %v408, 0.0
    %v469 = vmax.f32 %v411, 0.0
    %v470 = vmax.f32 %v416, 0.0
    %v471 = vmax.f32 %v419, 0.0
    %v472 = vmax.f32 %v424, 0.0
    %v473 = vmax.f32 %v427, 0.0
    %v474 = vmax.f32 %v432, 0.0
    %v475 = vmax.f32 %v435, 0.0
    %v476 = vmax.f32 %v440, 0.0
    %v477 = vmax.f32 %v443, 0.0
    %v478 = vpack.c.bf16 %v447, %v446
    %v479 = vpack.c.bf16 %v449, %v448
    %v480 = vpack.c.bf16 %v451, %v450
    %v481 = vpack.c.bf16 %v453, %v452
    %v482 = vpack.c.bf16 %v455, %v454
    %v483 = vpack.c.bf16 %v457, %v456
    %v484 = vpack.c.bf16 %v459, %v458
    %v485 = vpack.c.bf16 %v461, %v460
    %v486 = vpack.c.bf16 %v463, %v462
    %v487 = vpack.c.bf16 %v465, %v464
    %v488 = vpack.c.bf16 %v467, %v466
    %v489 = vpack.c.bf16 %v469, %v468
    %v490 = vpack.c.bf16 %v471, %v470
    %v491 = vpack.c.bf16 %v473, %v472
    %v492 = vpack.c.bf16 %v475, %v474
    %v493 = vpack.c.bf16 %v477, %v476
    %v494 = vld [vmem:[#allocation8] sm:$0xf]
    %v495 = vld [vmem:[#allocation8 + $0x4] sm:$0xf]
    %v496 = vld [vmem:[#allocation8 + $0x8] sm:$0xf]
    %v497 = vld [vmem:[#allocation8 + $0xc] sm:$0xf]
    %v498 = vld [vmem:[#allocation8 + $0x10] sm:$0xf]
    %v499 = vld [vmem:[#allocation8 + $0x14] sm:$0xf]
    %v500 = vld [vmem:[#allocation8 + $0x18] sm:$0xf]
    %v501 = vld [vmem:[#allocation8 + $0x1c] sm:$0xf]
    %v502 = vld [vmem:[#allocation8 + $0x20] sm:$0xf]
    %v503 = vld [vmem:[#allocation8 + $0x24] sm:$0xf]
    %v504 = vld [vmem:[#allocation8 + $0x28] sm:$0xf]
    %v505 = vld [vmem:[#allocation8 + $0x2c] sm:$0xf]
    %v506 = vld [vmem:[#allocation8 + $0x30] sm:$0xf]
    %v507 = vld [vmem:[#allocation8 + $0x34] sm:$0xf]
    %v508 = vld [vmem:[#allocation8 + $0x38] sm:$0xf]
    %v509 = vld [vmem:[#allocation8 + $0x3c] sm:$0xf]
    %v510 = vld [vmem:[#allocation10] sm:$0x1]
    %v512 = vlaneseq
    %v513 = vshrl.u32 %v512, 7
    %v514 = vsub.s32 0, %v513
    %v515 = vrot.slane %v510, %v514
    %v533 = vunpack.c.l.b16 %v494
    %v534 = vunpack.c.l.b16 %v495
    %v535 = vunpack.c.l.b16 %v496
    %v536 = vunpack.c.l.b16 %v497
    %v537 = vunpack.c.l.b16 %v498
    %v538 = vunpack.c.l.b16 %v499
    %v539 = vunpack.c.l.b16 %v500
    %v540 = vunpack.c.l.b16 %v501
    %v541 = vunpack.c.l.b16 %v502
    %v542 = vunpack.c.l.b16 %v503
    %v543 = vunpack.c.l.b16 %v504
    %v544 = vunpack.c.l.b16 %v505
    %v545 = vunpack.c.l.b16 %v506
    %v546 = vunpack.c.l.b16 %v507
    %v547 = vunpack.c.l.b16 %v508
    %v548 = vunpack.c.l.b16 %v509
    %v549 = vpack.c.b16 %v534, %v533
    %v550 = vpack.c.b16 %v536, %v535
    %v551 = vpack.c.b16 %v538, %v537
    %v552 = vpack.c.b16 %v540, %v539
    %v553 = vpack.c.b16 %v542, %v541
    %v554 = vpack.c.b16 %v544, %v543
    %v555 = vpack.c.b16 %v546, %v545
    %v556 = vpack.c.b16 %v548, %v547
    %565 = vmatprep.subr.bf16.mxu0 0
    %566 = vmatpush1.bf16.msra.mxu0 %v549
    %567 = vmatprep.subr.bf16.mxu0 0
    %568 = vmatpush1.bf16.msra.mxu0 %v550
    %569 = vmatprep.subr.bf16.mxu0 0
    %570 = vmatpush1.bf16.msra.mxu0 %v551
    %571 = vmatprep.subr.bf16.mxu0 0
    %572 = vmatpush1.bf16.msra.mxu0 %v552
    %573 = vmatprep.subr.bf16.mxu0 0
    %574 = vmatpush1.bf16.msra.mxu0 %v553
    %575 = vmatprep.subr.bf16.mxu0 0
    %576 = vmatpush1.bf16.msra.mxu0 %v554
    %577 = vmatprep.subr.bf16.mxu0 0
    %578 = vmatpush1.bf16.msra.mxu0 %v555
    %579 = vmatprep.subr.bf16.mxu0 0
    %580 = vmatpush1.bf16.msra.mxu0 %v556
    %581 = vmatprep.subr.bf16.mxu0 0
    %582 = vmatpush1.bf16.msra.mxu0 0
    %583 = vmatprep.subr.bf16.mxu0 0
    %584 = vmatpush1.bf16.msra.mxu0 0
    %585 = vmatprep.subr.bf16.mxu0 0
    %586 = vmatpush1.bf16.msra.mxu0 0
    %587 = vmatprep.subr.bf16.mxu0 0
    %588 = vmatpush1.bf16.msra.mxu0 0
    %589 = vmatprep.subr.bf16.mxu0 0
    %590 = vmatpush1.bf16.msra.mxu0 0
    %591 = vmatprep.subr.bf16.mxu0 0
    %592 = vmatpush1.bf16.msra.mxu0 0
    %593 = vmatprep.subr.bf16.mxu0 0
    %594 = vmatpush1.bf16.msra.mxu0 0
    %595 = vmatprep.subr.bf16.mxu0 0
    %596 = vmatpush1.bf16.msra.mxu0 0
    %597 = vmatprep.mubr.bf16.mxu0 0
    %598 = vmatmul.mubr.bf16.gmra.mrb[0].mxu0 %v478
    %v599 = vpop.f32.mrb[0].mxu0
    %v600 = vadd.f32 %v515, %v599
    %v601 = vpop.f32.mrb[0].mxu0
    %v602 = vpop.f32.mrb[0].mxu0
    %v603 = vadd.f32 %v515, %v602
    %v604 = vpop.f32.mrb[0].mxu0
    %605 = vmatprep.mubr.bf16.mxu0 0
    %606 = vmatmul.mubr.bf16.gmra.mrb[0].mxu0 %v479
    %v607 = vpop.f32.mrb[0].mxu0
    %v608 = vadd.f32 %v515, %v607
    %v609 = vpop.f32.mrb[0].mxu0
    %v610 = vpop.f32.mrb[0].mxu0
    %v611 = vadd.f32 %v515, %v610
    %v612 = vpop.f32.mrb[0].mxu0
    %613 = vmatprep.mubr.bf16.mxu0 0
    %614 = vmatmul.mubr.bf16.gmra.mrb[0].mxu0 %v480
    %v615 = vpop.f32.mrb[0].mxu0
    %v616 = vadd.f32 %v515, %v615
    %v617 = vpop.f32.mrb[0].mxu0
    %v618 = vpop.f32.mrb[0].mxu0
    %v619 = vadd.f32 %v515, %v618
    %v620 = vpop.f32.mrb[0].mxu0
    %621 = vmatprep.mubr.bf16.mxu0 0
    %622 = vmatmul.mubr.bf16.gmra.mrb[0].mxu0 %v481
    %v623 = vpop.f32.mrb[0].mxu0
    %v624 = vadd.f32 %v515, %v623
    %v625 = vpop.f32.mrb[0].mxu0
    %v626 = vpop.f32.mrb[0].mxu0
    %v627 = vadd.f32 %v515, %v626
    %v628 = vpop.f32.mrb[0].mxu0
    %629 = vmatprep.mubr.bf16.mxu0 0
    %630 = vmatmul.mubr.bf16.gmra.mrb[0].mxu0 %v482
    %v631 = vpop.f32.mrb[0].mxu0
    %v632 = vadd.f32 %v515, %v631
    %v633 = vpop.f32.mrb[0].mxu0
    %v634 = vpop.f32.mrb[0].mxu0
    %v635 = vadd.f32 %v515, %v634
    %v636 = vpop.f32.mrb[0].mxu0
    %637 = vmatprep.mubr.bf16.mxu0 0
    %638 = vmatmul.mubr.bf16.gmra.mrb[0].mxu0 %v483
    %v639 = vpop.f32.mrb[0].mxu0
    %v640 = vadd.f32 %v515, %v639
    %v641 = vpop.f32.mrb[0].mxu0
    %v642 = vpop.f32.mrb[0].mxu0
    %v643 = vadd.f32 %v515, %v642
    %v644 = vpop.f32.mrb[0].mxu0
    %645 = vmatprep.mubr.bf16.mxu0 0
    %646 = vmatmul.mubr.bf16.gmra.mrb[0].mxu0 %v484
    %v647 = vpop.f32.mrb[0].mxu0
    %v648 = vadd.f32 %v515, %v647
    %v649 = vpop.f32.mrb[0].mxu0
    %v650 = vpop.f32.mrb[0].mxu0
    %v651 = vadd.f32 %v515, %v650
    %v652 = vpop.f32.mrb[0].mxu0
    %653 = vmatprep.mubr.bf16.mxu0 0
    %654 = vmatmul.mubr.bf16.gmra.mrb[0].mxu0 %v485
    %v655 = vpop.f32.mrb[0].mxu0
    %v656 = vadd.f32 %v515, %v655
    %v657 = vpop.f32.mrb[0].mxu0
    %v658 = vpop.f32.mrb[0].mxu0
    %v659 = vadd.f32 %v515, %v658
    %v660 = vpop.f32.mrb[0].mxu0
    %661 = vmatprep.mubr.bf16.mxu0 0
    %662 = vmatmul.mubr.bf16.gmra.mrb[0].mxu0 %v486
    %v663 = vpop.f32.mrb[0].mxu0
    %v664 = vadd.f32 %v515, %v663
    %v665 = vpop.f32.mrb[0].mxu0
    %v666 = vpop.f32.mrb[0].mxu0
    %v667 = vadd.f32 %v515, %v666
    %v668 = vpop.f32.mrb[0].mxu0
    %669 = vmatprep.mubr.bf16.mxu0 0
    %670 = vmatmul.mubr.bf16.gmra.mrb[0].mxu0 %v487
    %v671 = vpop.f32.mrb[0].mxu0
    %v672 = vadd.f32 %v515, %v671
    %v673 = vpop.f32.mrb[0].mxu0
    %v674 = vpop.f32.mrb[0].mxu0
    %v675 = vadd.f32 %v515, %v674
    %v676 = vpop.f32.mrb[0].mxu0
    %677 = vmatprep.mubr.bf16.mxu0 0
    %678 = vmatmul.mubr.bf16.gmra.mrb[0].mxu0 %v488
    %v679 = vpop.f32.mrb[0].mxu0
    %v680 = vadd.f32 %v515, %v679
    %v681 = vpop.f32.mrb[0].mxu0
    %v682 = vpop.f32.mrb[0].mxu0
    %v683 = vadd.f32 %v515, %v682
    %v684 = vpop.f32.mrb[0].mxu0
    %685 = vmatprep.mubr.bf16.mxu0 0
    %686 = vmatmul.mubr.bf16.gmra.mrb[0].mxu0 %v489
    %v687 = vpop.f32.mrb[0].mxu0
    %v688 = vadd.f32 %v515, %v687
    %v689 = vpop.f32.mrb[0].mxu0
    %v690 = vpop.f32.mrb[0].mxu0
    %v691 = vadd.f32 %v515, %v690
    %v692 = vpop.f32.mrb[0].mxu0
    %693 = vmatprep.mubr.bf16.mxu0 0
    %694 = vmatmul.mubr.bf16.gmra.mrb[0].mxu0 %v490
    %v695 = vpop.f32.mrb[0].mxu0
    %v696 = vadd.f32 %v515, %v695
    %v697 = vpop.f32.mrb[0].mxu0
    %v698 = vpop.f32.mrb[0].mxu0
    %v699 = vadd.f32 %v515, %v698
    %v700 = vpop.f32.mrb[0].mxu0
    %701 = vmatprep.mubr.bf16.mxu0 0
    %702 = vmatmul.mubr.bf16.gmra.mrb[0].mxu0 %v491
    %v703 = vpop.f32.mrb[0].mxu0
    %v704 = vadd.f32 %v515, %v703
    %v705 = vpop.f32.mrb[0].mxu0
    %v706 = vpop.f32.mrb[0].mxu0
    %v707 = vadd.f32 %v515, %v706
    %v708 = vpop.f32.mrb[0].mxu0
    %709 = vmatprep.mubr.bf16.mxu0 0
    %710 = vmatmul.mubr.bf16.gmra.mrb[0].mxu0 %v492
    %v711 = vpop.f32.mrb[0].mxu0
    %v712 = vadd.f32 %v515, %v711
    %v713 = vpop.f32.mrb[0].mxu0
    %v714 = vpop.f32.mrb[0].mxu0
    %v715 = vadd.f32 %v515, %v714
    %v716 = vpop.f32.mrb[0].mxu0
    %717 = vmatprep.mubr.bf16.mxu0 0
    %718 = vmatmul.mubr.bf16.gmra.mrb[0].mxu0 %v493
    %v719 = vpop.f32.mrb[0].mxu0
    %v720 = vadd.f32 %v515, %v719
    %v721 = vpop.f32.mrb[0].mxu0
    %v722 = vpop.f32.mrb[0].mxu0
    %v723 = vadd.f32 %v515, %v722
    %v724 = vpop.f32.mrb[0].mxu0
    %725 = vdwg.mxu0
    %726 = vst [vmem:[#allocation11] sm:$0xff] %v600
    %727 = vst [vmem:[#allocation11 + $0x8] sm:$0xff] %v603
    %728 = vst [vmem:[#allocation11 + $0x10] sm:$0xff] %v608
    %729 = vst [vmem:[#allocation11 + $0x18] sm:$0xff] %v611
    %730 = vst [vmem:[#allocation11 + $0x20] sm:$0xff] %v616
    %731 = vst [vmem:[#allocation11 + $0x28] sm:$0xff] %v619
    %732 = vst [vmem:[#allocation11 + $0x30] sm:$0xff] %v624
    %733 = vst [vmem:[#allocation11 + $0x38] sm:$0xff] %v627
    %734 = vst [vmem:[#allocation11 + $0x40] sm:$0xff] %v632
    %735 = vst [vmem:[#allocation11 + $0x48] sm:$0xff] %v635
    %736 = vst [vmem:[#allocation11 + $0x50] sm:$0xff] %v640
    %737 = vst [vmem:[#allocation11 + $0x58] sm:$0xff] %v643
    %738 = vst [vmem:[#allocation11 + $0x60] sm:$0xff] %v648
    %739 = vst [vmem:[#allocation11 + $0x68] sm:$0xff] %v651
    %740 = vst [vmem:[#allocation11 + $0x70] sm:$0xff] %v656
    %741 = vst [vmem:[#allocation11 + $0x78] sm:$0xff] %v659
    %742 = vst [vmem:[#allocation11 + $0x80] sm:$0xff] %v664
    %743 = vst [vmem:[#allocation11 + $0x88] sm:$0xff] %v667
    %744 = vst [vmem:[#allocation11 + $0x90] sm:$0xff] %v672
    %745 = vst [vmem:[#allocation11 + $0x98] sm:$0xff] %v675
    %746 = vst [vmem:[#allocation11 + $0xa0] sm:$0xff] %v680
    %747 = vst [vmem:[#allocation11 + $0xa8] sm:$0xff] %v683
    %748 = vst [vmem:[#allocation11 + $0xb0] sm:$0xff] %v688
    %749 = vst [vmem:[#allocation11 + $0xb8] sm:$0xff] %v691
    %750 = vst [vmem:[#allocation11 + $0xc0] sm:$0xff] %v696
    %751 = vst [vmem:[#allocation11 + $0xc8] sm:$0xff] %v699
    %752 = vst [vmem:[#allocation11 + $0xd0] sm:$0xff] %v704
    %753 = vst [vmem:[#allocation11 + $0xd8] sm:$0xff] %v707
    %754 = vst [vmem:[#allocation11 + $0xe0] sm:$0xff] %v712
    %755 = vst [vmem:[#allocation11 + $0xe8] sm:$0xff] %v715
    %756 = vst [vmem:[#allocation11 + $0xf0] sm:$0xff] %v720
    %757 = vst [vmem:[#allocation11 + $0xf8] sm:$0xff] %v723
    // Predicated region
    $region42: #{positionwise_feedforward.1} parent=1 // pred_check
      _
    $region43: #{positionwise_feedforward.1} parent=1 // pred_check_branch
      %759 = sbr.rel (0) target = $region45
    $region44: #{positionwise_feedforward.1} parent=1 // pred_region
      %s761 = ssub.s32 4096, 4096
      %762 = vsyncadd [#allocation4], %s761
      %s763 = sshll.u32 [#allocation11], 4
      %s764 = int_to_ptr.vmem [resolvable:$true] %s763
      %769 = dma.vmem_to_hbm [thread:$0]  %s764, 4096, %s5, [#allocation4], 128, 128, 8
    $region45: #{positionwise_feedforward.1} parent=1 // pred_fallthru
      _
    // Predicated region
    $region46: #{positionwise_feedforward.1} parent=1 // pred_check
      _
    $region47: #{positionwise_feedforward.1} parent=1 // pred_check_branch
      %771 = sbr.rel (0) target = $region49
    $region48: #{positionwise_feedforward.1} parent=1 // pred_region
      %772 = dma.done [#allocation4], 4096
    $region49: #{positionwise_feedforward.1} parent=1 // pred_fallthru
      _
    %773 = vsyncpa [#allocation3], 1
    %774 = vsyncpa [#allocation6], 1
    %775 = vsyncpa [#allocation9], 1
    %776 = vsyncpa [#allocation4], 1

</llo_original>
